<compile_context>
chip_gen: v7x
topology: tpu7x:2x2x1
jax: 0.10.0
libtpu: 0.0.40
codegen_flags: <defaults>
</compile_context>

<pallas_src>
import functools

import jax
import jax.numpy as jnp
from jax.experimental import pallas as pl
from jax.experimental.pallas import tpu as pltpu


def _adapter_kernel(x_ref, wd_ref, bd_ref, wu_ref, bu_ref, o_ref):
    # x_ref / o_ref: (bn, C, T)  lane-dense pixel slab (T = tile_hw lanes).
    # wd_ref: (Cr, C)   down-projection weight (PyTorch (out,in) layout, as-is)
    # bd_ref: (Cr, 1)
    # wu_ref: (C, Cr)   up-projection weight (as-is)
    # bu_ref: (C, 1)
    wd = wd_ref[...]
    bd = bd_ref[...]
    wu = wu_ref[...]
    bu = bu_ref[...]
    bn = x_ref.shape[0]           # static block dim (kept small via bn_cap)
    # Unrolled loop of 2-D dots: keeps lanes dense, no in-kernel transpose.
    for i in range(bn):
        x = x_ref[i]                                                  # (C, T)
        h = jnp.dot(wd, x, preferred_element_type=jnp.float32) + bd   # (Cr, T)
        h = jnp.maximum(h, 0.0)                                       # ReLU
        y = jnp.dot(wu, h, preferred_element_type=jnp.float32) + bu   # (C, T)
        o_ref[i] = (y + x).astype(o_ref.dtype)                        # residual


def _largest_divisor_leq(n, cap):
    cap = max(1, min(n, cap))
    for d in range(cap, 0, -1):
        if n % d == 0:
            return d
    return 1


def _choose_tiling(N, C, HW, itemsize, target_block_bytes, bn_cap):
    """Pick (bn, t_hw) so one block moves ~target_block_bytes of activations."""
    target_pixels = max(128, target_block_bytes // max(1, C * itemsize))
    if HW >= target_pixels:
        # One image already provides a large lane-dense block: tile HW only.
        t_hw = min(HW, (target_pixels // 128) * 128)
        bn = 1
    else:
        # Small feature maps: take the whole HW extent and fold several images
        # into one block (contiguous in HBM since x is (N, C, HW) contiguous).
        t_hw = HW
        want_bn = max(1, target_pixels // max(1, HW))
        bn = _largest_divisor_leq(N, min(want_bn, bn_cap))
    # Keep at least 2 grid steps when the batch allows it so a 2-TensorCore
    # chip (v7x megacore) does not leave one core idle.
    n_hw_tiles = pl.cdiv(HW, t_hw)
    if (N // bn) * n_hw_tiles < 2 and N > 1:
        bn = _largest_divisor_leq(N, max(1, N // 2))
    return bn, t_hw


@functools.partial(jax.jit, static_argnames=("target_block_bytes", "bn_cap"))
def conv_adapter(x_nchw, w_down, b_down, w_up, b_up, *,
                 target_block_bytes=2 << 20, bn_cap=32):
    """ConvAdapter forward, identical semantics to the PyTorch module.

    Args:
      x_nchw: (N, C, H, W) float32 input (PyTorch convention).
      w_down: (Cr, C)  down_project 1x1 conv weight (out, in), kernel dims squeezed.
      b_down: (Cr,)
      w_up:   (C, Cr)  up_project 1x1 conv weight.
      b_up:   (C,)
      target_block_bytes: activation bytes per grid step (~2 MiB is a good
        cross-generation default; ~4x that is the double-buffered VMEM cost).
      bn_cap: max images folded into one block (bounds kernel unrolling).
    Returns:
      (N, C, H, W) output.
    """
    N, C, H, W = x_nchw.shape
    Cr = w_down.shape[0]
    HW = H * W
    itemsize = jnp.dtype(x_nchw.dtype).itemsize

    # Free reshape (NCHW is contiguous): (N, C, H, W) -> (N, C, H*W).
    x3 = x_nchw.reshape(N, C, HW)

    bn, t_hw = _choose_tiling(N, C, HW, itemsize, target_block_bytes, bn_cap)
    # Lane-density contract: t_hw is a 128-multiple or the full HW extent.
    assert t_hw % 128 == 0 or t_hw == HW
    assert N % bn == 0

    grid = (N // bn, pl.cdiv(HW, t_hw))

    bd2 = b_down.reshape(Cr, 1)     # broadcast over the lane (pixel) axis
    bu2 = b_up.reshape(C, 1)

    # Rough double-buffered footprint: in + out blocks, 2 buffers each, + weights.
    block_bytes = bn * C * t_hw * itemsize
    vmem_est = 4 * block_bytes + 4 * 4 * (Cr * C + C * Cr + Cr + C)
    compiler_kwargs = dict(dimension_semantics=("parallel", "parallel"))
    if vmem_est > (12 << 20):
        # Let oversized user-chosen blocks through while staying well under
        # v7x's 64 MiB physical VMEM (v5e/v6e have 128 MiB physical).
        compiler_kwargs["vmem_limit_bytes"] = min(48 << 20, vmem_est + (4 << 20))

    out = pl.pallas_call(
        _adapter_kernel,
        out_shape=jax.ShapeDtypeStruct((N, C, HW), x_nchw.dtype),
        grid_spec=pltpu.PrefetchScalarGridSpec(
            num_scalar_prefetch=0,
            grid=grid,
            in_specs=[
                # Activation slab: bn images x full channels x t_hw pixels.
                pl.BlockSpec((bn, C, t_hw), lambda nb, t: (nb, 0, t)),
                pl.BlockSpec((Cr, C), lambda nb, t: (0, 0)),   # Wd (resident)
                pl.BlockSpec((Cr, 1), lambda nb, t: (0, 0)),   # bd
                pl.BlockSpec((C, Cr), lambda nb, t: (0, 0)),   # Wu
                pl.BlockSpec((C, 1), lambda nb, t: (0, 0)),    # bu
            ],
            out_specs=pl.BlockSpec((bn, C, t_hw), lambda nb, t: (nb, 0, t)),
        ),
        compiler_params=pltpu.CompilerParams(**compiler_kwargs),
        # NOTE: input_output_aliases={0: 0} (with donated x3) would let the
        # output reuse the input HBM buffer; skipped to keep the wrapper simple.
    )(x3, w_down, bd2, w_up, bu2)

    return out.reshape(N, C, H, W)


def _reference(x_nchw, w_down, b_down, w_up, b_up):
    # Pure-JAX reference matching PyTorch semantics (1x1 convs are channel matmuls).
    x = jnp.transpose(x_nchw, (0, 2, 3, 1))                    # NHWC
    h = jnp.einsum("nhwc,oc->nhwo", x, w_down) + b_down
    h = jnp.maximum(h, 0.0)
    y = jnp.einsum("nhwr,or->nhwo", h, w_up) + b_up
    y = y + x
    return jnp.transpose(y, (0, 3, 1, 2))


if __name__ == "__main__":
    # Small shapes consistent with the module: dim=8, reduction=4 -> hidden=2.
    N, C, H, W = 2, 8, 16, 16
    reduction = 4
    Cr = C // reduction

    key = jax.random.PRNGKey(0)
    kx, kwd, kbd, kwu, kbu = jax.random.split(key, 5)

    x = jax.random.normal(kx, (N, C, H, W), dtype=jnp.float32)
    # Conv2d(dim, dim//r, 1) weight: (out=Cr, in=C, 1, 1) -> kernel dims squeezed.
    w_down = jax.random.normal(kwd, (Cr, C), dtype=jnp.float32) * 0.1
    b_down = jax.random.normal(kbd, (Cr,), dtype=jnp.float32) * 0.1
    # Conv2d(dim//r, dim, 1) weight: (out=C, in=Cr, 1, 1)
    w_up = jax.random.normal(kwu, (C, Cr), dtype=jnp.float32) * 0.1
    b_up = jax.random.normal(kbu, (C,), dtype=jnp.float32) * 0.1

    out = jax.block_until_ready(conv_adapter(x, w_down, b_down, w_up, b_up))

    ref = _reference(x, w_down, b_down, w_up, b_up)
    assert out.shape == (N, C, H, W)
    assert jnp.allclose(out, ref, atol=1e-5, rtol=1e-5)

    print("KERNEL_OK")
</pallas_src>

<mosaic_0001>
module attributes {stable_mosaic.version = 11 : i64} {
  func.func @_adapter_kernel(%arg0: i32, %arg1: i32, %arg2: memref<1x8x256xf32, #tpu.memory_space<vmem>>, %arg3: memref<2x8xf32, #tpu.memory_space<vmem>>, %arg4: memref<2x1xf32, #tpu.memory_space<vmem>>, %arg5: memref<8x2xf32, #tpu.memory_space<vmem>>, %arg6: memref<8x1xf32, #tpu.memory_space<vmem>>, %arg7: memref<1x8x256xf32, #tpu.memory_space<vmem>>) attributes {dimension_semantics = [#tpu.dimension_semantics<parallel>, #tpu.dimension_semantics<parallel>], iteration_bounds = array<i64: 2, 1>, scalar_prefetch = 0 : i64, scratch_operands = 0 : i64, tpu.core_type = #tpu.core_type<tc>, window_params = [{transform_indices = @transform_0, window_bounds = array<i64: 1, 8, 256>}, {pipeline_mode = #tpu.pipeline_mode<synchronous>, transform_indices = @transform_1, window_bounds = array<i64: 2, 8>}, {pipeline_mode = #tpu.pipeline_mode<synchronous>, transform_indices = @transform_2, window_bounds = array<i64: 2, 1>}, {pipeline_mode = #tpu.pipeline_mode<synchronous>, transform_indices = @transform_3, window_bounds = array<i64: 8, 2>}, {pipeline_mode = #tpu.pipeline_mode<synchronous>, transform_indices = @transform_4, window_bounds = array<i64: 8, 1>}, {transform_indices = @transform_5, window_bounds = array<i64: 1, 8, 256>}]} {
    %c0 = arith.constant 0 : index
    %c0_0 = arith.constant 0 : index
    %0 = vector.load %arg3[%c0, %c0_0] : memref<2x8xf32, #tpu.memory_space<vmem>>, vector<2x8xf32>
    %c0_1 = arith.constant 0 : index
    %c0_2 = arith.constant 0 : index
    %1 = vector.load %arg4[%c0_1, %c0_2] : memref<2x1xf32, #tpu.memory_space<vmem>>, vector<2x1xf32>
    %c0_3 = arith.constant 0 : index
    %c0_4 = arith.constant 0 : index
    %2 = vector.load %arg5[%c0_3, %c0_4] : memref<8x2xf32, #tpu.memory_space<vmem>>, vector<8x2xf32>
    %c0_5 = arith.constant 0 : index
    %c0_6 = arith.constant 0 : index
    %3 = vector.load %arg6[%c0_5, %c0_6] : memref<8x1xf32, #tpu.memory_space<vmem>>, vector<8x1xf32>
    %c0_7 = arith.constant 0 : index
    %c0_8 = arith.constant 0 : index
    %c0_9 = arith.constant 0 : index
    %4 = vector.load %arg2[%c0_7, %c0_8, %c0_9] : memref<1x8x256xf32, #tpu.memory_space<vmem>>, vector<1x8x256xf32>
    %5 = vector.shape_cast %4 : vector<1x8x256xf32> to vector<8x256xf32>
    %cst = arith.constant dense<0.000000e+00> : vector<2x256xf32>
    %6 = tpu.matmul %0, %5, %cst {dimension_numbers = #tpu.dot_dimension_numbers<[1], [0], [0], [1], [0, 0, 1, 1], [], []>} : vector<2x8xf32>, vector<8x256xf32>, vector<2x256xf32> -> vector<2x256xf32>
    %7 = vector.broadcast %1 : vector<2x1xf32> to vector<2x256xf32>
    %8 = arith.addf %6, %7 : vector<2x256xf32>
    %cst_10 = arith.constant 0.000000e+00 : f32
    %9 = vector.broadcast %cst_10 : f32 to vector<2x256xf32>
    %10 = arith.maximumf %8, %9 : vector<2x256xf32>
    %cst_11 = arith.constant dense<0.000000e+00> : vector<8x256xf32>
    %11 = tpu.matmul %2, %10, %cst_11 {dimension_numbers = #tpu.dot_dimension_numbers<[1], [0], [0], [1], [0, 0, 1, 1], [], []>} : vector<8x2xf32>, vector<2x256xf32>, vector<8x256xf32> -> vector<8x256xf32>
    %12 = vector.broadcast %3 : vector<8x1xf32> to vector<8x256xf32>
    %13 = arith.addf %11, %12 : vector<8x256xf32>
    %14 = arith.addf %13, %5 : vector<8x256xf32>
    %c0_12 = arith.constant 0 : index
    %c0_13 = arith.constant 0 : index
    %c0_14 = arith.constant 0 : index
    %15 = vector.load %arg7[%c0_12, %c0_13, %c0_14] : memref<1x8x256xf32, #tpu.memory_space<vmem>>, vector<1x8x256xf32>
    %16 = vector.shape_cast %15 : vector<1x8x256xf32> to vector<8x256xf32>
    %17 = vector.shape_cast %14 : vector<8x256xf32> to vector<1x8x256xf32>
    tpu.vector_store %arg7[%c0_12, %c0_13, %c0_14], %17 {strides = array<i32>} : memref<1x8x256xf32, #tpu.memory_space<vmem>>, vector<1x8x256xf32>,
    return
  }
  func.func @transform_0(%arg0: i32, %arg1: i32) -> (i32, i32, i32) {
    %c0_i32 = arith.constant 0 : i32
    %c0_i32_0 = arith.constant 0 : i32
    return %arg0, %c0_i32, %arg1 : i32, i32, i32
  }
  func.func @transform_1(%arg0: i32, %arg1: i32) -> (i32, i32) {
    %c0_i32 = arith.constant 0 : i32
    %c0_i32_0 = arith.constant 0 : i32
    %c0_i32_1 = arith.constant 0 : i32
    return %c0_i32, %c0_i32_0 : i32, i32
  }
  func.func @transform_2(%arg0: i32, %arg1: i32) -> (i32, i32) {
    %c0_i32 = arith.constant 0 : i32
    %c0_i32_0 = arith.constant 0 : i32
    %c0_i32_1 = arith.constant 0 : i32
    return %c0_i32, %c0_i32_0 : i32, i32
  }
  func.func @transform_3(%arg0: i32, %arg1: i32) -> (i32, i32) {
    %c0_i32 = arith.constant 0 : i32
    %c0_i32_0 = arith.constant 0 : i32
    %c0_i32_1 = arith.constant 0 : i32
    return %c0_i32, %c0_i32_0 : i32, i32
  }
  func.func @transform_4(%arg0: i32, %arg1: i32) -> (i32, i32) {
    %c0_i32 = arith.constant 0 : i32
    %c0_i32_0 = arith.constant 0 : i32
    %c0_i32_1 = arith.constant 0 : i32
    return %c0_i32, %c0_i32_0 : i32, i32
  }
  func.func @transform_5(%arg0: i32, %arg1: i32) -> (i32, i32, i32) {
    %c0_i32 = arith.constant 0 : i32
    %c0_i32_0 = arith.constant 0 : i32
    return %arg0, %c0_i32, %arg1 : i32, i32, i32
  }
}

</mosaic_0001>

<llo_original>
// kernel: conv_adapter.1
$region0: #{conv_adapter.1}
  #allocation0 [shape = 'u32[]', space=smem, size = 0x4, offset = 0x4, fixed_abs, tag = 'smem constant byte address 0x4 - core index']
  #allocation1 [shape = 'u32[144,128]{1,0:T(1,128)}', space=vmem, size = 0x12000, scoped, tag = 'internal scratch']
  %s0 = inlined_call_operand.vmem [shape: f32[2,8,256], index: 0, kind: input, shape index: {}]
  %s1 = inlined_call_operand.vmem [shape: f32[2,8], index: 1, kind: input, shape index: {}]
  %s2 = inlined_call_operand.vmem [shape: f32[2,1], index: 2, kind: input, shape index: {}]
  %s3 = inlined_call_operand.vmem [shape: f32[8,2], index: 3, kind: input, shape index: {}]
  %s4 = inlined_call_operand.vmem [shape: f32[8,1], index: 4, kind: input, shape index: {}]
  %s5 = inlined_call_operand.vmem [shape: f32[2,8,256], index: 5, kind: output, shape index: {}]
  %s6 = sld [smem:[#allocation0]]
  $region53: #{conv_adapter.1} parent=0
    _
  %s8 = ssub.s32 1, %s6
  %s9 = scalar_select 0, %s8, %s6
  loop: start=0, step=1, limit=4
  $region2: #{conv_adapter.1} parent=0 // loop_pre_header
    _
  $region3: #{conv_adapter.1} parent=0 // loop_header
    %s11 = sphi 0, %s15
    %p12 = scmp.ge.s32.totalorder %s11, 4
    %s18 = sphi 0, %s30
    %s19 = sphi 0, %s26
    %s20 = sphi 0, %s18
    %s21 = sphi 0, %s19
    %s22 = sphi 0, %s20
    %s23 = sphi 0, %s21
    %s35 = sphi 0, %s37
    %s38 = sphi 0, %s35
    %s39 = sphi 0, %s38
    %s55 = sphi 0, %s39
    %s59 = sphi 0, %s59
    %s61 = sphi 0, %s59
    %s62 = sphi 0, %s61
    %s76 = sphi 0, %s62
    %s80 = sphi 0, %s80
    %s82 = sphi 0, %s80
    %s83 = sphi 0, %s82
    %s97 = sphi 0, %s83
    %s101 = sphi 0, %s101
    %s103 = sphi 0, %s101
    %s104 = sphi 0, %s103
    %s118 = sphi 0, %s104
    %s122 = sphi 0, %s122
    %s124 = sphi 0, %s122
    %s125 = sphi 0, %s124
    %s139 = sphi 0, %s125
    %s147 = sphi 0, %s149
    %s150 = sphi 0, %s147
    %s151 = sphi 0, %s150
    %s167 = sphi 0, %s151
  $region4: #{conv_adapter.1} parent=0 // loop_header_branch
    %14 = sbr.rel (%p12) target = $region8
  $region5: #{conv_adapter.1} parent=0 // loop_body
    %s16 = ssub.s32 %s11, 1
    %s17 = ssub.s32 %s11, 2
    %s24 = sadd.s32 1, %s19
    %p25 = scmp.ge.s32.totalorder %s24, 1
    %s26 = scalar_select %p25, 0, %s24
    %s27 = sadd.s32 1, %s18
    %s28 = scalar_select %p25, %s27, %s18
    %p29 = scmp.ge.s32.totalorder %s28, 2
    %s30 = scalar_select %p29, 0, %s28
    %s31 = ssub.s32 %s18, %s30
    %s32 = ssub.s32 %s19, %s26
    %s33 = sor.u32 %s31, %s32
    %p34 = scmp.eq.s32.totalorder %s33, 0
    %s36 = sadd.s32 %s35, 1
    %s37 = scalar_select %p34, %s35, %s36
    %p40 = pneg %p34
    %p41 = scmp.eq.s32.totalorder %s11, 1
    %p42 = por %p40, %p41
    %p43 = scmp.ne.s32.totalorder %s35, %s38
    %p44 = scmp.eq.s32.totalorder %s11, 0
    %p45 = por %p43, %p44
    %p46 = scmp.ne.s32.totalorder %s35, %s38
    %p47 = scmp.eq.s32.totalorder %s16, 1
    %p48 = por %p46, %p47
    %p49 = scmp.ne.s32.totalorder %s38, %s39
    %p50 = scmp.eq.s32.totalorder %s16, 0
    %p51 = por %p49, %p50
    %p52 = scmp.ne.s32.totalorder %s38, %s39
    %p53 = scmp.eq.s32.totalorder %s17, 1
    %p54 = por %p52, %p53
    %p56 = scmp.ne.s32.totalorder %s39, %s55
    %p57 = scmp.eq.s32.totalorder %s17, 0
    %p58 = por %p56, %p57
    %s60 = sadd.s32 %s59, 1
    %p63 = scmp.eq.s32.totalorder %s11, 1
    %p64 = scmp.ne.s32.totalorder %s59, %s61
    %p65 = scmp.eq.s32.totalorder %s11, 0
    %p66 = por %p64, %p65
    %p67 = scmp.ne.s32.totalorder %s59, %s61
    %p68 = scmp.eq.s32.totalorder %s16, 1
    %p69 = por %p67, %p68
    %p70 = scmp.ne.s32.totalorder %s61, %s62
    %p71 = scmp.eq.s32.totalorder %s16, 0
    %p72 = por %p70, %p71
    %p73 = scmp.ne.s32.totalorder %s61, %s62
    %p74 = scmp.eq.s32.totalorder %s17, 1
    %p75 = por %p73, %p74
    %p77 = scmp.ne.s32.totalorder %s62, %s76
    %p78 = scmp.eq.s32.totalorder %s17, 0
    %p79 = por %p77, %p78
    %s81 = sadd.s32 %s80, 1
    %p84 = scmp.eq.s32.totalorder %s11, 1
    %p85 = scmp.ne.s32.totalorder %s80, %s82
    %p86 = scmp.eq.s32.totalorder %s11, 0
    %p87 = por %p85, %p86
    %p88 = scmp.ne.s32.totalorder %s80, %s82
    %p89 = scmp.eq.s32.totalorder %s16, 1
    %p90 = por %p88, %p89
    %p91 = scmp.ne.s32.totalorder %s82, %s83
    %p92 = scmp.eq.s32.totalorder %s16, 0
    %p93 = por %p91, %p92
    %p94 = scmp.ne.s32.totalorder %s82, %s83
    %p95 = scmp.eq.s32.totalorder %s17, 1
    %p96 = por %p94, %p95
    %p98 = scmp.ne.s32.totalorder %s83, %s97
    %p99 = scmp.eq.s32.totalorder %s17, 0
    %p100 = por %p98, %p99
    %s102 = sadd.s32 %s101, 1
    %p105 = scmp.eq.s32.totalorder %s11, 1
    %p106 = scmp.ne.s32.totalorder %s101, %s103
    %p107 = scmp.eq.s32.totalorder %s11, 0
    %p108 = por %p106, %p107
    %p109 = scmp.ne.s32.totalorder %s101, %s103
    %p110 = scmp.eq.s32.totalorder %s16, 1
    %p111 = por %p109, %p110
    %p112 = scmp.ne.s32.totalorder %s103, %s104
    %p113 = scmp.eq.s32.totalorder %s16, 0
    %p114 = por %p112, %p113
    %p115 = scmp.ne.s32.totalorder %s103, %s104
    %p116 = scmp.eq.s32.totalorder %s17, 1
    %p117 = por %p115, %p116
    %p119 = scmp.ne.s32.totalorder %s104, %s118
    %p120 = scmp.eq.s32.totalorder %s17, 0
    %p121 = por %p119, %p120
    %s123 = sadd.s32 %s122, 1
    %p126 = scmp.eq.s32.totalorder %s11, 1
    %p127 = scmp.ne.s32.totalorder %s122, %s124
    %p128 = scmp.eq.s32.totalorder %s11, 0
    %p129 = por %p127, %p128
    %p130 = scmp.ne.s32.totalorder %s122, %s124
    %p131 = scmp.eq.s32.totalorder %s16, 1
    %p132 = por %p130, %p131
    %p133 = scmp.ne.s32.totalorder %s124, %s125
    %p134 = scmp.eq.s32.totalorder %s16, 0
    %p135 = por %p133, %p134
    %p136 = scmp.ne.s32.totalorder %s124, %s125
    %p137 = scmp.eq.s32.totalorder %s17, 1
    %p138 = por %p136, %p137
    %p140 = scmp.ne.s32.totalorder %s125, %s139
    %p141 = scmp.eq.s32.totalorder %s17, 0
    %p142 = por %p140, %p141
    %s143 = ssub.s32 %s18, %s30
    %s144 = ssub.s32 %s19, %s26
    %s145 = sor.u32 %s143, %s144
    %p146 = scmp.eq.s32.totalorder %s145, 0
    %s148 = sadd.s32 %s147, 1
    %s149 = scalar_select %p146, %s147, %s148
    %p152 = pneg %p146
    %p153 = scmp.eq.s32.totalorder %s11, 1
    %p154 = por %p152, %p153
    %p155 = scmp.ne.s32.totalorder %s147, %s150
    %p156 = scmp.eq.s32.totalorder %s11, 0
    %p157 = por %p155, %p156
    %p158 = scmp.ne.s32.totalorder %s147, %s150
    %p159 = scmp.eq.s32.totalorder %s16, 1
    %p160 = por %p158, %p159
    %p161 = scmp.ne.s32.totalorder %s150, %s151
    %p162 = scmp.eq.s32.totalorder %s16, 0
    %p163 = por %p161, %p162
    %p164 = scmp.ne.s32.totalorder %s150, %s151
    %p165 = scmp.eq.s32.totalorder %s17, 1
    %p166 = por %p164, %p165
    %p168 = scmp.ne.s32.totalorder %s151, %s167
    %p169 = scmp.eq.s32.totalorder %s17, 0
    %p170 = por %p168, %p169
    %p171 = scmp.le.s32.totalorder 1, %s11
    %p172 = scmp.lt.s32.totalorder %s11, 3
    %p173 = pnand %p171, %p172
    %p174 = pneg %p173
    // Predicated region
    $region9: #{conv_adapter.1} parent=5 // pred_check
      _
    $region10: #{conv_adapter.1} parent=5 // pred_check_branch
      %176 = sbr.rel (%p173) target = $region12
    $region11: #{conv_adapter.1} parent=5 // pred_region
      %s177 = ssub.s32 %s11, 1
      // Predicated region
      $region13: #{conv_adapter.1} parent=11 // pred_check
        %p178 = pneg %p72
      $region14: #{conv_adapter.1} parent=11 // pred_check_branch
        %180 = sbr.rel (%p178) target = $region16
      $region15: #{conv_adapter.1} parent=11 // pred_region
        _
      $region16: #{conv_adapter.1} parent=11 // pred_fallthru
        _
      // Predicated region
      $region17: #{conv_adapter.1} parent=11 // pred_check
        %p181 = pneg %p93
      $region18: #{conv_adapter.1} parent=11 // pred_check_branch
        %183 = sbr.rel (%p181) target = $region20
      $region19: #{conv_adapter.1} parent=11 // pred_region
        _
      $region20: #{conv_adapter.1} parent=11 // pred_fallthru
        _
      // Predicated region
      $region21: #{conv_adapter.1} parent=11 // pred_check
        %p184 = pneg %p114
      $region22: #{conv_adapter.1} parent=11 // pred_check_branch
        %186 = sbr.rel (%p184) target = $region24
      $region23: #{conv_adapter.1} parent=11 // pred_region
        _
      $region24: #{conv_adapter.1} parent=11 // pred_fallthru
        _
      // Predicated region
      $region25: #{conv_adapter.1} parent=11 // pred_check
        %p187 = pneg %p135
      $region26: #{conv_adapter.1} parent=11 // pred_check_branch
        %189 = sbr.rel (%p187) target = $region28
      $region27: #{conv_adapter.1} parent=11 // pred_region
        _
      $region28: #{conv_adapter.1} parent=11 // pred_fallthru
        _
    $region12: #{conv_adapter.1} parent=5 // pred_fallthru
      _
    %p190 = scmp.lt.s32.totalorder %s11, 2
    // Predicated region
    $region29: #{conv_adapter.1} parent=5 // pred_check
      %p191 = pneg %p190
    $region30: #{conv_adapter.1} parent=5 // pred_check_branch
      %193 = sbr.rel (%p191) target = $region32
    $region31: #{conv_adapter.1} parent=5 // pred_region
      // Predicated region
      $region33: #{conv_adapter.1} parent=31 // pred_check
        %p194 = pneg %p45
      $region34: #{conv_adapter.1} parent=31 // pred_check_branch
        %196 = sbr.rel (%p194) target = $region36
      $region35: #{conv_adapter.1} parent=31 // pred_region
        %s197 = smul.u32 2, %s19
        %p198 = scmp.lt.s32.totalorder %s18, 1
        %s199 = scalar_select %p198, %s18, 1
        %p200 = scmp.lt.s32.totalorder %s197, 1
        %s201 = scalar_select %p200, %s197, 1
        %s202 = smul.addr %s199, 2
        %s203 = sadd.s32 %s201, %s202
        %s204 = smul.addr %s203, 8
        %s205 = scalar_lea.vmem %s0, %s204
        %s206 = smul.u32 2, %s19
      $region36: #{conv_adapter.1} parent=31 // pred_fallthru
        _
    $region32: #{conv_adapter.1} parent=5 // pred_fallthru
      _
    %p207 = scmp.le.s32.totalorder 1, %s11
    %p208 = scmp.lt.s32.totalorder %s11, 3
    %p209 = pnand %p207, %p208
    %p210 = pneg %p209
    // Predicated region
    $region37: #{conv_adapter.1} parent=5 // pred_check
      _
    $region38: #{conv_adapter.1} parent=5 // pred_check_branch
      %212 = sbr.rel (%p209) target = $region40
    $region39: #{conv_adapter.1} parent=5 // pred_region
      %s213 = ssub.s32 %s11, 1
      %s214 = smul.u32 2, %s21
      %p215 = scmp.lt.s32.totalorder %s20, 1
      %s216 = scalar_select %p215, %s20, 1
      %p217 = scmp.lt.s32.totalorder %s214, 1
      %s218 = scalar_select %p217, %s214, 1
      %s219 = smul.addr %s216, 2
      %s220 = sadd.s32 %s218, %s219
      %s221 = smul.addr %s220, 8
      %s222 = scalar_lea.vmem %s0, %s221
      %p223 = pneg %p51
      %p224 = pneg %p48
      %p225 = pneg %p72
      %p226 = pneg %p69
      %p227 = pneg %p93
      %p228 = pneg %p90
      %p229 = pneg %p114
      %p230 = pneg %p111
      %p231 = pneg %p135
      %p232 = pneg %p132
      %p233 = pneg %p163
      %p234 = pneg %p160
      %s235 = smul.u32 2, %s21
      %p236 = scmp.lt.s32.totalorder %s20, 1
      %s237 = scalar_select %p236, %s20, 1
      %p238 = scmp.lt.s32.totalorder %s235, 1
      %s239 = scalar_select %p238, %s235, 1
      %s240 = smul.addr %s237, 2
      %s241 = sadd.s32 %s239, %s240
      %s242 = smul.addr %s241, 8
      %s243 = scalar_lea.vmem %s5, %s242
      %s244 = smul.u32 2, %s21
      %p245 = scmp.lt.s32.totalorder %s20, 1
      %s246 = scalar_select %p245, %s20, 1
      %p247 = scmp.lt.s32.totalorder %s244, 1
      %s248 = scalar_select %p247, %s244, 1
      %s249 = smul.addr %s246, 2
      %s250 = sadd.s32 %s248, %s249
      %s251 = smul.addr %s250, 8
      %s252 = scalar_lea.vmem %s0, %s251
      %s253 = smul.u32 2, %s21
      %s254 = smul.u32 2, %s21
      %p255 = scmp.lt.s32.totalorder %s20, 1
      %s256 = scalar_select %p255, %s20, 1
      %p257 = scmp.lt.s32.totalorder %s254, 1
      %s258 = scalar_select %p257, %s254, 1
      %s259 = smul.addr %s256, 2
      %s260 = sadd.s32 %s258, %s259
      %s261 = smul.addr %s260, 8
      %s262 = scalar_lea.vmem %s5, %s261
      %s263 = smul.u32 2, %s21
      %v264 = vld [vmem:[%s1] sm:$0x3]
      %v265 = vld [vmem:[%s2] sm:$0x3]
      %v266 = vld [vmem:[%s3] sm:$0xff]
      %v267 = vld [vmem:[%s4] sm:$0xff]
      %v268 = vld [vmem:[%s252] sm:$0xff]
      %v269 = vld [vmem:[%s252 + $0x8] sm:$0xff]
      %271 = vset.pattern.permute.xlu0 0
      %272 = vperm.xlu0 %271, %v265
      %v273 = vpop.permute.xlu0 %272
      %vm275 = vcmask 64512
      %v277 = vsel %vm275, %v264, 0
      %279 = vmatprep.subr.mxu0 %v269
      %280 = vmatpush1.msra.mxu0 %v268
      %281 = vmatprep.subr.mxu0 0.0
      %282 = vmatpush1.msra.mxu0 0.0
      %283 = vmatprep.subr.mxu0 0.0
      %284 = vmatpush1.msra.mxu0 0.0
      %285 = vmatprep.subr.mxu0 0.0
      %286 = vmatpush1.msra.mxu0 0.0
      %287 = vmatprep.subr.mxu0 0.0
      %288 = vmatpush1.msra.mxu0 0.0
      %289 = vmatprep.subr.mxu0 0.0
      %290 = vmatpush1.msra.mxu0 0.0
      %291 = vmatprep.subr.mxu0 0.0
      %292 = vmatpush1.msra.mxu0 0.0
      %293 = vmatprep.subr.mxu0 0.0
      %294 = vmatpush1.msra.mxu0 0.0
      %295 = vmatprep.subr.mxu0 0.0
      %296 = vmatpush1.msra.mxu0 0.0
      %297 = vmatprep.subr.mxu0 0.0
      %298 = vmatpush1.msra.mxu0 0.0
      %299 = vmatprep.subr.mxu0 0.0
      %300 = vmatpush1.msra.mxu0 0.0
      %301 = vmatprep.subr.mxu0 0.0
      %302 = vmatpush1.msra.mxu0 0.0
      %303 = vmatprep.subr.mxu0 0.0
      %304 = vmatpush1.msra.mxu0 0.0
      %305 = vmatprep.subr.mxu0 0.0
      %306 = vmatpush1.msra.mxu0 0.0
      %307 = vmatprep.subr.mxu0 0.0
      %308 = vmatpush1.msra.mxu0 0.0
      %309 = vmatprep.subr.mxu0 0.0
      %310 = vmatpush1.msra.mxu0 0.0
      %311 = vmatprep.subr.mxu0 0.0
      %312 = vmatpush1.msra.mxu0 0.0
      %313 = vmatprep.subr.mxu0 0.0
      %314 = vmatpush1.msra.mxu0 0.0
      %315 = vmatprep.subr.mxu0 0.0
      %316 = vmatpush1.msra.mxu0 0.0
      %317 = vmatprep.subr.mxu0 0.0
      %318 = vmatpush1.msra.mxu0 0.0
      %319 = vmatprep.subr.mxu0 0.0
      %320 = vmatpush1.msra.mxu0 0.0
      %321 = vmatprep.subr.mxu0 0.0
      %322 = vmatpush1.msra.mxu0 0.0
      %323 = vmatprep.subr.mxu0 0.0
      %324 = vmatpush1.msra.mxu0 0.0
      %325 = vmatprep.subr.mxu0 0.0
      %326 = vmatpush1.msra.mxu0 0.0
      %327 = vmatprep.subr.mxu0 0.0
      %328 = vmatpush1.msra.mxu0 0.0
      %329 = vmatprep.subr.mxu0 0.0
      %330 = vmatpush1.msra.mxu0 0.0
      %331 = vmatprep.subr.mxu0 0.0
      %332 = vmatpush1.msra.mxu0 0.0
      %333 = vmatprep.subr.mxu0 0.0
      %334 = vmatpush1.msra.mxu0 0.0
      %335 = vmatprep.subr.mxu0 0.0
      %336 = vmatpush1.msra.mxu0 0.0
      %337 = vmatprep.subr.mxu0 0.0
      %338 = vmatpush1.msra.mxu0 0.0
      %339 = vmatprep.subr.mxu0 0.0
      %340 = vmatpush1.msra.mxu0 0.0
      %341 = vmatprep.subr.mxu0 0.0
      %342 = vmatpush1.msra.mxu0 0.0
      %343 = vmatprep.mubr.f32.mxu0 0.0
      %344 = vmatmul.mubr.f32.gmra.mrb[0].mxu0 %v277
      %v345 = vpop.f32.mrb[0].mxu0
      %v346 = vadd.f32 %v273, %v345
      %v347 = vpop.f32.mrb[0].mxu0
      %v348 = vadd.f32 %v273, %v347
      %349 = vdwg.mxu0
      %v350 = vmax.f32 %v346, 0.0
      %v351 = vmax.f32 %v348, 0.0
      %353 = vset.pattern.permute.xlu0 0
      %354 = vperm.xlu0 %353, %v267
      %v355 = vpop.permute.xlu0 %354
      %vm357 = vcmask 15360
      %v359 = vsel %vm357, %v266, 0
      %vm361 = vcmask 1041408
      %v363 = vsel %vm361, %v350, 0
      %v366 = vsel %vm361, %v351, 0
      %368 = vmatprep.subr.mxu0 %v366
      %369 = vmatpush1.msra.mxu0 %v363
      %370 = vmatprep.subr.mxu0 0.0
      %371 = vmatpush1.msra.mxu0 0.0
      %372 = vmatprep.subr.mxu0 0.0
      %373 = vmatpush1.msra.mxu0 0.0
      %374 = vmatprep.subr.mxu0 0.0
      %375 = vmatpush1.msra.mxu0 0.0
      %376 = vmatprep.subr.mxu0 0.0
      %377 = vmatpush1.msra.mxu0 0.0
      %378 = vmatprep.subr.mxu0 0.0
      %379 = vmatpush1.msra.mxu0 0.0
      %380 = vmatprep.subr.mxu0 0.0
      %381 = vmatpush1.msra.mxu0 0.0
      %382 = vmatprep.subr.mxu0 0.0
      %383 = vmatpush1.msra.mxu0 0.0
      %384 = vmatprep.subr.mxu0 0.0
      %385 = vmatpush1.msra.mxu0 0.0
      %386 = vmatprep.subr.mxu0 0.0
      %387 = vmatpush1.msra.mxu0 0.0
      %388 = vmatprep.subr.mxu0 0.0
      %389 = vmatpush1.msra.mxu0 0.0
      %390 = vmatprep.subr.mxu0 0.0
      %391 = vmatpush1.msra.mxu0 0.0
      %392 = vmatprep.subr.mxu0 0.0
      %393 = vmatpush1.msra.mxu0 0.0
      %394 = vmatprep.subr.mxu0 0.0
      %395 = vmatpush1.msra.mxu0 0.0
      %396 = vmatprep.subr.mxu0 0.0
      %397 = vmatpush1.msra.mxu0 0.0
      %398 = vmatprep.subr.mxu0 0.0
      %399 = vmatpush1.msra.mxu0 0.0
      %400 = vmatprep.subr.mxu0 0.0
      %401 = vmatpush1.msra.mxu0 0.0
      %402 = vmatprep.subr.mxu0 0.0
      %403 = vmatpush1.msra.mxu0 0.0
      %404 = vmatprep.subr.mxu0 0.0
      %405 = vmatpush1.msra.mxu0 0.0
      %406 = vmatprep.subr.mxu0 0.0
      %407 = vmatpush1.msra.mxu0 0.0
      %408 = vmatprep.subr.mxu0 0.0
      %409 = vmatpush1.msra.mxu0 0.0
      %410 = vmatprep.subr.mxu0 0.0
      %411 = vmatpush1.msra.mxu0 0.0
      %412 = vmatprep.subr.mxu0 0.0
      %413 = vmatpush1.msra.mxu0 0.0
      %414 = vmatprep.subr.mxu0 0.0
      %415 = vmatpush1.msra.mxu0 0.0
      %416 = vmatprep.subr.mxu0 0.0
      %417 = vmatpush1.msra.mxu0 0.0
      %418 = vmatprep.subr.mxu0 0.0
      %419 = vmatpush1.msra.mxu0 0.0
      %420 = vmatprep.subr.mxu0 0.0
      %421 = vmatpush1.msra.mxu0 0.0
      %422 = vmatprep.subr.mxu0 0.0
      %423 = vmatpush1.msra.mxu0 0.0
      %424 = vmatprep.subr.mxu0 0.0
      %425 = vmatpush1.msra.mxu0 0.0
      %426 = vmatprep.subr.mxu0 0.0
      %427 = vmatpush1.msra.mxu0 0.0
      %428 = vmatprep.subr.mxu0 0.0
      %429 = vmatpush1.msra.mxu0 0.0
      %430 = vmatprep.subr.mxu0 0.0
      %431 = vmatpush1.msra.mxu0 0.0
      %432 = vmatprep.mubr.f32.mxu0 0.0
      %433 = vmatmul.mubr.f32.gmra.mrb[0].mxu0 %v359
      %v434 = vpop.f32.mrb[0].mxu0
      %v435 = vadd.f32 %v355, %v434
      %v436 = vpop.f32.mrb[0].mxu0
      %v437 = vadd.f32 %v355, %v436
      %438 = vdwg.mxu0
      %v439 = vadd.f32 %v435, %v268
      %v440 = vadd.f32 %v437, %v269
      %441 = vst [vmem:[%s262] sm:$0xff] %v439
      %442 = vst [vmem:[%s262 + $0x8] sm:$0xff] %v440
      %s443 = smul.u32 2, %s21
      %p444 = scmp.lt.s32.totalorder %s20, 1
      %s445 = scalar_select %p444, %s20, 1
      %p446 = scmp.lt.s32.totalorder %s443, 1
      %s447 = scalar_select %p446, %s443, 1
      %s448 = smul.addr %s445, 2
      %s449 = sadd.s32 %s447, %s448
      %s450 = smul.addr %s449, 8
      %s451 = scalar_lea.vmem %s5, %s450
      // Predicated region
      $region41: #{conv_adapter.1} parent=39 // pred_check
        %p452 = pneg %p160
      $region42: #{conv_adapter.1} parent=39 // pred_check_branch
        %454 = sbr.rel (%p452) target = $region44
      $region43: #{conv_adapter.1} parent=39 // pred_region
        %s455 = smul.u32 2, %s21
      $region44: #{conv_adapter.1} parent=39 // pred_fallthru
        _
    $region40: #{conv_adapter.1} parent=5 // pred_fallthru
      _
    %p456 = scmp.le.s32.totalorder 2, %s11
    // Predicated region
    $region45: #{conv_adapter.1} parent=5 // pred_check
      %p457 = pneg %p456
    $region46: #{conv_adapter.1} parent=5 // pred_check_branch
      %459 = sbr.rel (%p457) target = $region48
    $region47: #{conv_adapter.1} parent=5 // pred_region
      %s460 = ssub.s32 %s11, 2
      // Predicated region
      $region49: #{conv_adapter.1} parent=47 // pred_check
        %p461 = pneg %p166
      $region50: #{conv_adapter.1} parent=47 // pred_check_branch
        %463 = sbr.rel (%p461) target = $region52
      $region51: #{conv_adapter.1} parent=47 // pred_region
        %s464 = smul.u32 2, %s23
        %p465 = scmp.lt.s32.totalorder %s22, 1
        %s466 = scalar_select %p465, %s22, 1
        %p467 = scmp.lt.s32.totalorder %s464, 1
        %s468 = scalar_select %p467, %s464, 1
        %s469 = smul.addr %s466, 2
        %s470 = sadd.s32 %s468, %s469
        %s471 = smul.addr %s470, 8
        %s472 = scalar_lea.vmem %s5, %s471
      $region52: #{conv_adapter.1} parent=47 // pred_fallthru
        _
    $region48: #{conv_adapter.1} parent=5 // pred_fallthru
      _
  $region6: #{conv_adapter.1} parent=0 // loop_footer
    %s15 = sadd.s32 1, %s11
  $region7: #{conv_adapter.1} parent=0 // loop_footer_branch
    %10 = sbr.rel target = $region3
  $region8: #{conv_adapter.1} parent=0 // loop_exit
    _

</llo_original>
